<compile_context>
chip_gen: v7x
topology: tpu7x:2x2x1
jax: 0.10.0
libtpu: 0.0.40
codegen_flags: <defaults>
</compile_context>

<pallas_src>
import jax
import jax.numpy as jnp
from jax.experimental import pallas as pl
from jax.experimental.pallas import tpu as pltpu


def mlp_kernel(x_ref, w1_ref, b1_ref, w2_ref, b2_ref, o_ref):
    # hidden = relu(x @ W1 + b1)   -- bf16 MXU operands, f32 accumulate
    x_bf = x_ref[...].astype(jnp.bfloat16)          # cast in-VMEM, not in HBM
    h = jnp.dot(x_bf, w1_ref[...], preferred_element_type=jnp.float32)
    h = jnp.maximum(h + b1_ref[...], 0.0)           # f32 VPU math (v5e-safe)
    # out = hidden @ W2 + b2       -- single intentional f32->bf16 downcast
    h_bf = h.astype(jnp.bfloat16)
    o = jnp.dot(h_bf, w2_ref[...], preferred_element_type=jnp.float32)
    # Final cast is the last op before the store (narrow, unpadded writeback).
    o_ref[...] = (o + b2_ref[...]).astype(o_ref.dtype)


def _round_up(n, m):
    return ((n + m - 1) // m) * m


def prepare_params(w1, b1, w2, b2):
    """One-time parameter prep (hoisted out of the per-call path).

    w1: (D_in, H), b1: (H,), w2: (H, D_out), b2: (D_out,) — (in, out) layout,
    i.e. the transpose of PyTorch's (out, in) Linear weights.
    """
    return (
        w1.astype(jnp.bfloat16),
        b1.astype(jnp.float32).reshape(1, -1),
        w2.astype(jnp.bfloat16),
        b2.astype(jnp.float32).reshape(1, -1),
    )


def net_forward(x, params, *, tile_b=1024):
    """x: (..., D_in), flattened to (B, D_in) like torch's x.view(-1, D_in)."""
    w1, b1, w2, b2 = params
    D_in, H = w1.shape
    D_out = w2.shape[1]

    x2d = x.reshape(-1, D_in)
    B = x2d.shape[0]

    # Batch tiling: second-minor block dim must be a multiple of 8; force a
    # multiple of 16 for bf16 sublane packing.  If the whole batch fits one
    # tile, collapse to grid=(1,) (no per-step overhead, no batch padding).
    B8 = _round_up(B, 8)
    if B8 <= tile_b:
        tile_b = B8
    else:
        tile_b = _round_up(tile_b, 16)
    Bp = _round_up(B, tile_b)

    if Bp != B:
        # Padded rows compute relu(b1) @ W2 + b2 (garbage) and are sliced off
        # below; nothing inside the kernel aggregates over the batch.
        xp = jnp.zeros((Bp, D_in), x2d.dtype).at[:B, :].set(x2d)
    else:
        xp = x2d

    out_dtype = x.dtype
    x_bytes = jnp.dtype(xp.dtype).itemsize
    o_bytes = jnp.dtype(out_dtype).itemsize
    flops = 2 * Bp * (D_in * H + H * D_out)
    bytes_accessed = (Bp * D_in * x_bytes + Bp * D_out * o_bytes
                      + w1.size * 2 + w2.size * 2 + b1.size * 4 + b2.size * 4)

    grid = (Bp // tile_b,)

    out = pl.pallas_call(
        mlp_kernel,
        out_shape=jax.ShapeDtypeStruct((Bp, D_out), out_dtype),
        grid=grid,
        in_specs=[
            # x: batch-tiled; last dim == full array dim -> no 128-lane pad.
            pl.BlockSpec((tile_b, D_in), lambda i: (i, 0)),
            # Weights / biases: full arrays, constant index map -> VMEM
            # resident while x/out tiles stream (tiny at these shapes).
            pl.BlockSpec((D_in, H), lambda i: (0, 0)),
            pl.BlockSpec((1, H), lambda i: (0, 0)),
            pl.BlockSpec((H, D_out), lambda i: (0, 0)),
            pl.BlockSpec((1, D_out), lambda i: (0, 0)),
        ],
        # Unpadded, final-dtype output block: accept the masked vst; HBM
        # writeback bytes are the binding constraint, not VPU/store slots.
        out_specs=pl.BlockSpec((tile_b, D_out), lambda i: (i, 0)),
        compiler_params=pltpu.CompilerParams(
            dimension_semantics=("parallel",)),
        cost_estimate=pl.CostEstimate(
            flops=flops, transcendentals=0, bytes_accessed=bytes_accessed),
    )(xp, w1, b1, w2, b2)

    return out[:B] if Bp != B else out


if __name__ == "__main__":
    # Small shapes implied by the module: Net(D_in=32, H=64, D_out=16).
    # x is (3, 8, 32) to exercise the x.view(-1, D_in) path (B = 24 rows);
    # tile_b=16 gives a multi-step, batch-padded grid (Bp=32, grid=(2,)).
    D_in, H, D_out = 32, 64, 16
    x_shape = (3, 8, D_in)

    key = jax.random.PRNGKey(0)
    kx, k1, k2, k3, k4 = jax.random.split(key, 5)

    x = jax.random.normal(kx, x_shape, dtype=jnp.float32)
    w1 = jax.random.normal(k1, (D_in, H), dtype=jnp.float32) * (1.0 / D_in ** 0.5)
    b1 = jax.random.normal(k2, (H,), dtype=jnp.float32) * 0.1
    w2 = jax.random.normal(k3, (H, D_out), dtype=jnp.float32) * (1.0 / H ** 0.5)
    b2 = jax.random.normal(k4, (D_out,), dtype=jnp.float32) * 0.1

    params = prepare_params(w1, b1, w2, b2)
    out = net_forward(x, params, tile_b=16)
    jax.block_until_ready(out)

    # Reference emulating the same bf16-operand / f32-accumulate numerics.
    x_bf = x.reshape(-1, D_in).astype(jnp.bfloat16).astype(jnp.float32)
    w1_bf = w1.astype(jnp.bfloat16).astype(jnp.float32)
    w2_bf = w2.astype(jnp.bfloat16).astype(jnp.float32)
    h_ref = jnp.maximum(x_bf @ w1_bf + b1, 0.0)
    h_ref = h_ref.astype(jnp.bfloat16).astype(jnp.float32)
    ref = h_ref @ w2_bf + b2

    assert out.shape == (3 * 8, D_out)
    assert out.dtype == x.dtype
    assert jnp.allclose(out, ref, atol=2e-3, rtol=2e-3)

    print("KERNEL_OK")
</pallas_src>

<mosaic_0001>
module attributes {stable_mosaic.version = 11 : i64} {
  func.func @mlp_kernel(%arg0: i32, %arg1: memref<16x32xf32, #tpu.memory_space<vmem>>, %arg2: memref<32x64xbf16, #tpu.memory_space<vmem>>, %arg3: memref<1x64xf32, #tpu.memory_space<vmem>>, %arg4: memref<64x16xbf16, #tpu.memory_space<vmem>>, %arg5: memref<1x16xf32, #tpu.memory_space<vmem>>, %arg6: memref<16x16xf32, #tpu.memory_space<vmem>>) attributes {dimension_semantics = [#tpu.dimension_semantics<parallel>], iteration_bounds = array<i64: 2>, scalar_prefetch = 0 : i64, scratch_operands = 0 : i64, tpu.core_type = #tpu.core_type<tc>, window_params = [{transform_indices = @transform_0, window_bounds = array<i64: 16, 32>}, {pipeline_mode = #tpu.pipeline_mode<synchronous>, transform_indices = @transform_1, window_bounds = array<i64: 32, 64>}, {pipeline_mode = #tpu.pipeline_mode<synchronous>, transform_indices = @transform_2, window_bounds = array<i64: 1, 64>}, {pipeline_mode = #tpu.pipeline_mode<synchronous>, transform_indices = @transform_3, window_bounds = array<i64: 64, 16>}, {pipeline_mode = #tpu.pipeline_mode<synchronous>, transform_indices = @transform_4, window_bounds = array<i64: 1, 16>}, {transform_indices = @transform_5, window_bounds = array<i64: 16, 16>}]} {
    %c0 = arith.constant 0 : index
    %c0_0 = arith.constant 0 : index
    %0 = vector.load %arg1[%c0, %c0_0] : memref<16x32xf32, #tpu.memory_space<vmem>>, vector<16x32xf32>
    %1 = arith.truncf %0 : vector<16x32xf32> to vector<16x32xbf16>
    %c0_1 = arith.constant 0 : index
    %c0_2 = arith.constant 0 : index
    %2 = vector.load %arg2[%c0_1, %c0_2] : memref<32x64xbf16, #tpu.memory_space<vmem>>, vector<32x64xbf16>
    %cst = arith.constant dense<0.000000e+00> : vector<16x64xf32>
    %3 = tpu.matmul %1, %2, %cst {dimension_numbers = #tpu.dot_dimension_numbers<[1], [0], [0], [1], [0, 0, 1, 1], [], []>} : vector<16x32xbf16>, vector<32x64xbf16>, vector<16x64xf32> -> vector<16x64xf32>
    %c0_3 = arith.constant 0 : index
    %c0_4 = arith.constant 0 : index
    %4 = vector.load %arg3[%c0_3, %c0_4] : memref<1x64xf32, #tpu.memory_space<vmem>>, vector<1x64xf32>
    %5 = vector.broadcast %4 : vector<1x64xf32> to vector<16x64xf32>
    %6 = arith.addf %3, %5 : vector<16x64xf32>
    %cst_5 = arith.constant 0.000000e+00 : f32
    %7 = vector.broadcast %cst_5 : f32 to vector<16x64xf32>
    %8 = arith.maximumf %6, %7 : vector<16x64xf32>
    %9 = arith.truncf %8 : vector<16x64xf32> to vector<16x64xbf16>
    %c0_6 = arith.constant 0 : index
    %c0_7 = arith.constant 0 : index
    %10 = vector.load %arg4[%c0_6, %c0_7] : memref<64x16xbf16, #tpu.memory_space<vmem>>, vector<64x16xbf16>
    %cst_8 = arith.constant dense<0.000000e+00> : vector<16x16xf32>
    %11 = tpu.matmul %9, %10, %cst_8 {dimension_numbers = #tpu.dot_dimension_numbers<[1], [0], [0], [1], [0, 0, 1, 1], [], []>} : vector<16x64xbf16>, vector<64x16xbf16>, vector<16x16xf32> -> vector<16x16xf32>
    %c0_9 = arith.constant 0 : index
    %c0_10 = arith.constant 0 : index
    %12 = vector.load %arg5[%c0_9, %c0_10] : memref<1x16xf32, #tpu.memory_space<vmem>>, vector<1x16xf32>
    %13 = vector.broadcast %12 : vector<1x16xf32> to vector<16x16xf32>
    %14 = arith.addf %11, %13 : vector<16x16xf32>
    %c0_11 = arith.constant 0 : index
    %c0_12 = arith.constant 0 : index
    %15 = vector.load %arg6[%c0_11, %c0_12] : memref<16x16xf32, #tpu.memory_space<vmem>>, vector<16x16xf32>
    tpu.vector_store %arg6[%c0_11, %c0_12], %14 {strides = array<i32>} : memref<16x16xf32, #tpu.memory_space<vmem>>, vector<16x16xf32>,
    return
  }
  func.func @transform_0(%arg0: i32) -> (i32, i32) {
    %c0_i32 = arith.constant 0 : i32
    %c0_i32_0 = arith.constant 0 : i32
    return %arg0, %c0_i32 : i32, i32
  }
  func.func @transform_1(%arg0: i32) -> (i32, i32) {
    %c0_i32 = arith.constant 0 : i32
    %c0_i32_0 = arith.constant 0 : i32
    %c0_i32_1 = arith.constant 0 : i32
    return %c0_i32, %c0_i32_0 : i32, i32
  }
  func.func @transform_2(%arg0: i32) -> (i32, i32) {
    %c0_i32 = arith.constant 0 : i32
    %c0_i32_0 = arith.constant 0 : i32
    %c0_i32_1 = arith.constant 0 : i32
    return %c0_i32, %c0_i32_0 : i32, i32
  }
  func.func @transform_3(%arg0: i32) -> (i32, i32) {
    %c0_i32 = arith.constant 0 : i32
    %c0_i32_0 = arith.constant 0 : i32
    %c0_i32_1 = arith.constant 0 : i32
    return %c0_i32, %c0_i32_0 : i32, i32
  }
  func.func @transform_4(%arg0: i32) -> (i32, i32) {
    %c0_i32 = arith.constant 0 : i32
    %c0_i32_0 = arith.constant 0 : i32
    %c0_i32_1 = arith.constant 0 : i32
    return %c0_i32, %c0_i32_0 : i32, i32
  }
  func.func @transform_5(%arg0: i32) -> (i32, i32) {
    %c0_i32 = arith.constant 0 : i32
    %c0_i32_0 = arith.constant 0 : i32
    return %arg0, %c0_i32 : i32, i32
  }
}

</mosaic_0001>

<llo_original>
// kernel: tpu_custom_call.1
$region0: #{tpu_custom_call.1}
  #allocation0 [shape = 'u32[]', space=smem, size = 0x4, offset = 0x4, fixed_abs, tag = 'smem constant byte address 0x4 - core index']
  #allocation1 [shape = 'u32[144,128]{1,0:T(1,128)}', space=vmem, size = 0x12000, scoped, tag = 'internal scratch']
  %s0 = inlined_call_operand.vmem [shape: f32[32,32], index: 0, kind: input, shape index: {}]
  %s1 = inlined_call_operand.hbm [shape: bf16[32,64], index: 1, kind: input, shape index: {}]
  %s2 = inlined_call_operand.vmem [shape: f32[1,64], index: 2, kind: input, shape index: {}]
  %s3 = inlined_call_operand.vmem [shape: bf16[64,16], index: 3, kind: input, shape index: {}]
  %s4 = inlined_call_operand.vmem [shape: f32[1,16], index: 4, kind: input, shape index: {}]
  %s5 = inlined_call_operand.vmem [shape: f32[32,16], index: 5, kind: output, shape index: {}]
  %s6 = sld [smem:[#allocation0]]
  $region57: #{tpu_custom_call.1} parent=0
    _
  %s8 = ssub.s32 1, %s6
  %s9 = scalar_select 0, %s8, %s6
  $region1: #{tpu_custom_call.1} parent=0
    #allocation2 [shape = 'u8[8192]{0}', space=vmem, size = 0x2000, scoped, tag = 'input window, operand 1, single buffered']
    #allocation3 [shape = 's32[2]{0}', space=sflag, size = 0x8, scoped, tag = 'scoped memory for tpu_custom_call.1']
    %10 = vsyncpa [#allocation3], 0
    loop: start=0, step=1, limit=4
    $region2: #{tpu_custom_call.1} parent=1 // loop_pre_header
      _
    $region3: #{tpu_custom_call.1} parent=1 // loop_header
      %s12 = sphi 0, %s16
      %p13 = scmp.ge.s32.totalorder %s12, 4
      %s22 = sphi 0, %s24
      %s25 = sphi 0, %s22
      %s26 = sphi 0, %s25
      %s42 = sphi 0, %s26
      %s46 = sphi 0, %s46
      %s48 = sphi 0, %s46
      %s49 = sphi 0, %s48
      %s63 = sphi 0, %s49
      %s67 = sphi 0, %s67
      %s69 = sphi 0, %s67
      %s70 = sphi 0, %s69
      %s84 = sphi 0, %s70
      %s88 = sphi 0, %s88
      %s90 = sphi 0, %s88
      %s91 = sphi 0, %s90
      %s105 = sphi 0, %s91
      %s109 = sphi 0, %s109
      %s111 = sphi 0, %s109
      %s112 = sphi 0, %s111
      %s126 = sphi 0, %s112
      %s132 = sphi 0, %s134
      %s135 = sphi 0, %s132
      %s136 = sphi 0, %s135
      %s152 = sphi 0, %s136
    $region4: #{tpu_custom_call.1} parent=1 // loop_header_branch
      %15 = sbr.rel (%p13) target = $region8
    $region5: #{tpu_custom_call.1} parent=1 // loop_body
      %s17 = ssub.s32 %s12, 1
      %s18 = ssub.s32 %s12, 2
      %s19 = sadd.s32 %s12, 1
      %s20 = ssub.s32 %s12, %s19
      %p21 = scmp.eq.s32.totalorder %s20, 0
      %s23 = sadd.s32 %s22, 1
      %s24 = scalar_select %p21, %s22, %s23
      %p27 = pneg %p21
      %p28 = scmp.eq.s32.totalorder %s12, 1
      %p29 = por %p27, %p28
      %p30 = scmp.ne.s32.totalorder %s22, %s25
      %p31 = scmp.eq.s32.totalorder %s12, 0
      %p32 = por %p30, %p31
      %p33 = scmp.ne.s32.totalorder %s22, %s25
      %p34 = scmp.eq.s32.totalorder %s17, 1
      %p35 = por %p33, %p34
      %p36 = scmp.ne.s32.totalorder %s25, %s26
      %p37 = scmp.eq.s32.totalorder %s17, 0
      %p38 = por %p36, %p37
      %p39 = scmp.ne.s32.totalorder %s25, %s26
      %p40 = scmp.eq.s32.totalorder %s18, 1
      %p41 = por %p39, %p40
      %p43 = scmp.ne.s32.totalorder %s26, %s42
      %p44 = scmp.eq.s32.totalorder %s18, 0
      %p45 = por %p43, %p44
      %s47 = sadd.s32 %s46, 1
      %p50 = scmp.eq.s32.totalorder %s12, 1
      %p51 = scmp.ne.s32.totalorder %s46, %s48
      %p52 = scmp.eq.s32.totalorder %s12, 0
      %p53 = por %p51, %p52
      %p54 = scmp.ne.s32.totalorder %s46, %s48
      %p55 = scmp.eq.s32.totalorder %s17, 1
      %p56 = por %p54, %p55
      %p57 = scmp.ne.s32.totalorder %s48, %s49
      %p58 = scmp.eq.s32.totalorder %s17, 0
      %p59 = por %p57, %p58
      %p60 = scmp.ne.s32.totalorder %s48, %s49
      %p61 = scmp.eq.s32.totalorder %s18, 1
      %p62 = por %p60, %p61
      %p64 = scmp.ne.s32.totalorder %s49, %s63
      %p65 = scmp.eq.s32.totalorder %s18, 0
      %p66 = por %p64, %p65
      %s68 = sadd.s32 %s67, 1
      %p71 = scmp.eq.s32.totalorder %s12, 1
      %p72 = scmp.ne.s32.totalorder %s67, %s69
      %p73 = scmp.eq.s32.totalorder %s12, 0
      %p74 = por %p72, %p73
      %p75 = scmp.ne.s32.totalorder %s67, %s69
      %p76 = scmp.eq.s32.totalorder %s17, 1
      %p77 = por %p75, %p76
      %p78 = scmp.ne.s32.totalorder %s69, %s70
      %p79 = scmp.eq.s32.totalorder %s17, 0
      %p80 = por %p78, %p79
      %p81 = scmp.ne.s32.totalorder %s69, %s70
      %p82 = scmp.eq.s32.totalorder %s18, 1
      %p83 = por %p81, %p82
      %p85 = scmp.ne.s32.totalorder %s70, %s84
      %p86 = scmp.eq.s32.totalorder %s18, 0
      %p87 = por %p85, %p86
      %s89 = sadd.s32 %s88, 1
      %p92 = scmp.eq.s32.totalorder %s12, 1
      %p93 = scmp.ne.s32.totalorder %s88, %s90
      %p94 = scmp.eq.s32.totalorder %s12, 0
      %p95 = por %p93, %p94
      %p96 = scmp.ne.s32.totalorder %s88, %s90
      %p97 = scmp.eq.s32.totalorder %s17, 1
      %p98 = por %p96, %p97
      %p99 = scmp.ne.s32.totalorder %s90, %s91
      %p100 = scmp.eq.s32.totalorder %s17, 0
      %p101 = por %p99, %p100
      %p102 = scmp.ne.s32.totalorder %s90, %s91
      %p103 = scmp.eq.s32.totalorder %s18, 1
      %p104 = por %p102, %p103
      %p106 = scmp.ne.s32.totalorder %s91, %s105
      %p107 = scmp.eq.s32.totalorder %s18, 0
      %p108 = por %p106, %p107
      %s110 = sadd.s32 %s109, 1
      %p113 = scmp.eq.s32.totalorder %s12, 1
      %p114 = scmp.ne.s32.totalorder %s109, %s111
      %p115 = scmp.eq.s32.totalorder %s12, 0
      %p116 = por %p114, %p115
      %p117 = scmp.ne.s32.totalorder %s109, %s111
      %p118 = scmp.eq.s32.totalorder %s17, 1
      %p119 = por %p117, %p118
      %p120 = scmp.ne.s32.totalorder %s111, %s112
      %p121 = scmp.eq.s32.totalorder %s17, 0
      %p122 = por %p120, %p121
      %p123 = scmp.ne.s32.totalorder %s111, %s112
      %p124 = scmp.eq.s32.totalorder %s18, 1
      %p125 = por %p123, %p124
      %p127 = scmp.ne.s32.totalorder %s112, %s126
      %p128 = scmp.eq.s32.totalorder %s18, 0
      %p129 = por %p127, %p128
      %s130 = ssub.s32 %s12, %s19
      %p131 = scmp.eq.s32.totalorder %s130, 0
      %s133 = sadd.s32 %s132, 1
      %s134 = scalar_select %p131, %s132, %s133
      %p137 = pneg %p131
      %p138 = scmp.eq.s32.totalorder %s12, 1
      %p139 = por %p137, %p138
      %p140 = scmp.ne.s32.totalorder %s132, %s135
      %p141 = scmp.eq.s32.totalorder %s12, 0
      %p142 = por %p140, %p141
      %p143 = scmp.ne.s32.totalorder %s132, %s135
      %p144 = scmp.eq.s32.totalorder %s17, 1
      %p145 = por %p143, %p144
      %p146 = scmp.ne.s32.totalorder %s135, %s136
      %p147 = scmp.eq.s32.totalorder %s17, 0
      %p148 = por %p146, %p147
      %p149 = scmp.ne.s32.totalorder %s135, %s136
      %p150 = scmp.eq.s32.totalorder %s18, 1
      %p151 = por %p149, %p150
      %p153 = scmp.ne.s32.totalorder %s136, %s152
      %p154 = scmp.eq.s32.totalorder %s18, 0
      %p155 = por %p153, %p154
      %p156 = scmp.le.s32.totalorder 1, %s12
      %p157 = scmp.lt.s32.totalorder %s12, 3
      %p158 = pnand %p156, %p157
      %p159 = pneg %p158
      // Predicated region
      $region9: #{tpu_custom_call.1} parent=5 // pred_check
        _
      $region10: #{tpu_custom_call.1} parent=5 // pred_check_branch
        %161 = sbr.rel (%p158) target = $region12
      $region11: #{tpu_custom_call.1} parent=5 // pred_region
        %s162 = ssub.s32 %s12, 1
        // Predicated region
        $region13: #{tpu_custom_call.1} parent=11 // pred_check
          %p163 = pneg %p59
        $region14: #{tpu_custom_call.1} parent=11 // pred_check_branch
          %165 = sbr.rel (%p163) target = $region16
        $region15: #{tpu_custom_call.1} parent=11 // pred_region
          %s167 = ssub.s32 256, 256
          %168 = vsyncadd [#allocation3], %s167
          %s169 = sshll.u32 [#allocation2], 4
          %s170 = int_to_ptr.vmem [resolvable:$true] %s169
          %175 = dma.hbm_to_vmem [thread:$0]  %s1, 256, %s170, [#allocation3], 64, 64, 4
        $region16: #{tpu_custom_call.1} parent=11 // pred_fallthru
          _
        // Predicated region
        $region17: #{tpu_custom_call.1} parent=11 // pred_check
          %p176 = pneg %p80
        $region18: #{tpu_custom_call.1} parent=11 // pred_check_branch
          %178 = sbr.rel (%p176) target = $region20
        $region19: #{tpu_custom_call.1} parent=11 // pred_region
          _
        $region20: #{tpu_custom_call.1} parent=11 // pred_fallthru
          _
        // Predicated region
        $region21: #{tpu_custom_call.1} parent=11 // pred_check
          %p179 = pneg %p101
        $region22: #{tpu_custom_call.1} parent=11 // pred_check_branch
          %181 = sbr.rel (%p179) target = $region24
        $region23: #{tpu_custom_call.1} parent=11 // pred_region
          _
        $region24: #{tpu_custom_call.1} parent=11 // pred_fallthru
          _
        // Predicated region
        $region25: #{tpu_custom_call.1} parent=11 // pred_check
          %p182 = pneg %p122
        $region26: #{tpu_custom_call.1} parent=11 // pred_check_branch
          %184 = sbr.rel (%p182) target = $region28
        $region27: #{tpu_custom_call.1} parent=11 // pred_region
          _
        $region28: #{tpu_custom_call.1} parent=11 // pred_fallthru
          _
      $region12: #{tpu_custom_call.1} parent=5 // pred_fallthru
        _
      %p185 = scmp.lt.s32.totalorder %s12, 2
      // Predicated region
      $region29: #{tpu_custom_call.1} parent=5 // pred_check
        %p186 = pneg %p185
      $region30: #{tpu_custom_call.1} parent=5 // pred_check_branch
        %188 = sbr.rel (%p186) target = $region32
      $region31: #{tpu_custom_call.1} parent=5 // pred_region
        // Predicated region
        $region33: #{tpu_custom_call.1} parent=31 // pred_check
          %p189 = pneg %p32
        $region34: #{tpu_custom_call.1} parent=31 // pred_check_branch
          %191 = sbr.rel (%p189) target = $region36
        $region35: #{tpu_custom_call.1} parent=31 // pred_region
          %s192 = smul.u32 2, %s12
          %p193 = scmp.lt.s32.totalorder %s192, 3
          %s194 = scalar_select %p193, %s192, 3
          %s195 = smul.addr %s194, 8
          %s196 = scalar_lea.vmem %s0, %s195
          %s197 = smul.u32 2, %s12
        $region36: #{tpu_custom_call.1} parent=31 // pred_fallthru
          _
      $region32: #{tpu_custom_call.1} parent=5 // pred_fallthru
        _
      %p198 = scmp.le.s32.totalorder 1, %s12
      %p199 = scmp.lt.s32.totalorder %s12, 3
      %p200 = pnand %p198, %p199
      %p201 = pneg %p200
      // Predicated region
      $region37: #{tpu_custom_call.1} parent=5 // pred_check
        _
      $region38: #{tpu_custom_call.1} parent=5 // pred_check_branch
        %203 = sbr.rel (%p200) target = $region40
      $region39: #{tpu_custom_call.1} parent=5 // pred_region
        %s204 = ssub.s32 %s12, 1
        // Predicated region
        $region41: #{tpu_custom_call.1} parent=39 // pred_check
          %p205 = pneg %p59
        $region42: #{tpu_custom_call.1} parent=39 // pred_check_branch
          %207 = sbr.rel (%p205) target = $region44
        $region43: #{tpu_custom_call.1} parent=39 // pred_region
          %208 = dma.done [#allocation3], 256
        $region44: #{tpu_custom_call.1} parent=39 // pred_fallthru
          _
        %s209 = smul.u32 2, %s17
        %p210 = scmp.lt.s32.totalorder %s209, 3
        %s211 = scalar_select %p210, %s209, 3
        %s212 = smul.addr %s211, 8
        %s213 = scalar_lea.vmem %s0, %s212
        %p214 = pneg %p38
        %p215 = pneg %p35
        %p216 = pneg %p59
        %p217 = pneg %p56
        %p218 = pneg %p80
        %p219 = pneg %p77
        %p220 = pneg %p101
        %p221 = pneg %p98
        %p222 = pneg %p122
        %p223 = pneg %p119
        %p224 = pneg %p148
        %p225 = pneg %p145
        %s226 = smul.u32 2, %s17
        %p227 = scmp.lt.s32.totalorder %s226, 3
        %s228 = scalar_select %p227, %s226, 3
        %s229 = smul.addr %s228, 8
        %s230 = scalar_lea.vmem %s5, %s229
        %s231 = smul.u32 2, %s17
        %p232 = scmp.lt.s32.totalorder %s231, 3
        %s233 = scalar_select %p232, %s231, 3
        %s234 = smul.addr %s233, 8
        %s235 = scalar_lea.vmem %s0, %s234
        %s236 = smul.u32 2, %s17
        %s237 = smul.u32 2, %s17
        %p238 = scmp.lt.s32.totalorder %s237, 3
        %s239 = scalar_select %p238, %s237, 3
        %s240 = smul.addr %s239, 8
        %s241 = scalar_lea.vmem %s5, %s240
        %s242 = smul.u32 2, %s17
        %v244 = vld [vmem:[%s235] sm:$0xff]
        %v245 = vld [vmem:[%s235 + $0x8] sm:$0xff]
        %v246 = vpack.c.bf16 %v245, %v244
        %v247 = vld [vmem:[#allocation2] sm:$0xf]
        %v248 = vld [vmem:[#allocation2 + $0x4] sm:$0xf]
        %v249 = vld [vmem:[#allocation2 + $0x8] sm:$0xf]
        %v250 = vld [vmem:[#allocation2 + $0xc] sm:$0xf]
        %v251 = vld [vmem:[%s2] sm:$0x1]
        %v253 = vlaneseq
        %v254 = vshrl.u32 %v253, 7
        %v255 = vsub.s32 0, %v254
        %v256 = vrot.slane %v251, %v255
        %v262 = vunpack.c.l.b16 %v247
        %v263 = vunpack.c.l.b16 %v248
        %v264 = vunpack.c.l.b16 %v249
        %v265 = vunpack.c.l.b16 %v250
        %v266 = vpack.c.b16 %v263, %v262
        %v267 = vpack.c.b16 %v265, %v264
        %vm270 = vcmask 261120
        %v272 = vsel %vm270, %v246, 0
        %274 = vmatprep.subr.bf16.mxu0 0
        %275 = vmatpush1.bf16.msra.mxu0 %v266
        %276 = vmatprep.subr.bf16.mxu0 0
        %277 = vmatpush1.bf16.msra.mxu0 %v267
        %278 = vmatprep.subr.bf16.mxu0 0
        %279 = vmatpush1.bf16.msra.mxu0 0
        %280 = vmatprep.subr.bf16.mxu0 0
        %281 = vmatpush1.bf16.msra.mxu0 0
        %282 = vmatprep.subr.bf16.mxu0 0
        %283 = vmatpush1.bf16.msra.mxu0 0
        %284 = vmatprep.subr.bf16.mxu0 0
        %285 = vmatpush1.bf16.msra.mxu0 0
        %286 = vmatprep.subr.bf16.mxu0 0
        %287 = vmatpush1.bf16.msra.mxu0 0
        %288 = vmatprep.subr.bf16.mxu0 0
        %289 = vmatpush1.bf16.msra.mxu0 0
        %290 = vmatprep.subr.bf16.mxu0 0
        %291 = vmatpush1.bf16.msra.mxu0 0
        %292 = vmatprep.subr.bf16.mxu0 0
        %293 = vmatpush1.bf16.msra.mxu0 0
        %294 = vmatprep.subr.bf16.mxu0 0
        %295 = vmatpush1.bf16.msra.mxu0 0
        %296 = vmatprep.subr.bf16.mxu0 0
        %297 = vmatpush1.bf16.msra.mxu0 0
        %298 = vmatprep.subr.bf16.mxu0 0
        %299 = vmatpush1.bf16.msra.mxu0 0
        %300 = vmatprep.subr.bf16.mxu0 0
        %301 = vmatpush1.bf16.msra.mxu0 0
        %302 = vmatprep.subr.bf16.mxu0 0
        %303 = vmatpush1.bf16.msra.mxu0 0
        %304 = vmatprep.subr.bf16.mxu0 0
        %305 = vmatpush1.bf16.msra.mxu0 0
        %306 = vmatprep.mubr.bf16.mxu0 0
        %307 = vmatmul.mubr.bf16.gmra.mrb[0].mxu0 %v272
        %v308 = vpop.f32.mrb[0].mxu0
        %v309 = vadd.f32 %v256, %v308
        %v310 = vpop.f32.mrb[0].mxu0
        %v311 = vpop.f32.mrb[0].mxu0
        %v312 = vadd.f32 %v256, %v311
        %v313 = vpop.f32.mrb[0].mxu0
        %314 = vdwg.mxu0
        %v315 = vmax.f32 %v309, 0.0
        %v316 = vmax.f32 %v312, 0.0
        %v317 = vpack.c.bf16 %v316, %v315
        %v318 = vld [vmem:[%s3] sm:$0xf]
        %v319 = vld [vmem:[%s3 + $0x4] sm:$0xf]
        %v320 = vld [vmem:[%s3 + $0x8] sm:$0xf]
        %v321 = vld [vmem:[%s3 + $0xc] sm:$0xf]
        %v322 = vld [vmem:[%s3 + $0x10] sm:$0xf]
        %v323 = vld [vmem:[%s3 + $0x14] sm:$0xf]
        %v324 = vld [vmem:[%s3 + $0x18] sm:$0xf]
        %v325 = vld [vmem:[%s3 + $0x1c] sm:$0xf]
        %v326 = vld [vmem:[%s4] sm:$0x1]
        %v328 = vlaneseq
        %v329 = vshrl.u32 %v328, 7
        %v330 = vsub.s32 0, %v329
        %v331 = vrot.slane %v326, %v330
        %v341 = vunpack.c.l.b16 %v318
        %v342 = vunpack.c.l.b16 %v319
        %v343 = vunpack.c.l.b16 %v320
        %v344 = vunpack.c.l.b16 %v321
        %v345 = vunpack.c.l.b16 %v322
        %v346 = vunpack.c.l.b16 %v323
        %v347 = vunpack.c.l.b16 %v324
        %v348 = vunpack.c.l.b16 %v325
        %v349 = vpack.c.b16 %v342, %v341
        %v350 = vpack.c.b16 %v344, %v343
        %v351 = vpack.c.b16 %v346, %v345
        %v352 = vpack.c.b16 %v348, %v347
        %vm357 = vcmask 523264
        %v359 = vsel %vm357, %v317, 0
        %361 = vmatprep.subr.bf16.mxu0 0
        %362 = vmatpush1.bf16.msra.mxu0 %v349
        %363 = vmatprep.subr.bf16.mxu0 0
        %364 = vmatpush1.bf16.msra.mxu0 %v350
        %365 = vmatprep.subr.bf16.mxu0 0
        %366 = vmatpush1.bf16.msra.mxu0 %v351
        %367 = vmatprep.subr.bf16.mxu0 0
        %368 = vmatpush1.bf16.msra.mxu0 %v352
        %369 = vmatprep.subr.bf16.mxu0 0
        %370 = vmatpush1.bf16.msra.mxu0 0
        %371 = vmatprep.subr.bf16.mxu0 0
        %372 = vmatpush1.bf16.msra.mxu0 0
        %373 = vmatprep.subr.bf16.mxu0 0
        %374 = vmatpush1.bf16.msra.mxu0 0
        %375 = vmatprep.subr.bf16.mxu0 0
        %376 = vmatpush1.bf16.msra.mxu0 0
        %377 = vmatprep.subr.bf16.mxu0 0
        %378 = vmatpush1.bf16.msra.mxu0 0
        %379 = vmatprep.subr.bf16.mxu0 0
        %380 = vmatpush1.bf16.msra.mxu0 0
        %381 = vmatprep.subr.bf16.mxu0 0
        %382 = vmatpush1.bf16.msra.mxu0 0
        %383 = vmatprep.subr.bf16.mxu0 0
        %384 = vmatpush1.bf16.msra.mxu0 0
        %385 = vmatprep.subr.bf16.mxu0 0
        %386 = vmatpush1.bf16.msra.mxu0 0
        %387 = vmatprep.subr.bf16.mxu0 0
        %388 = vmatpush1.bf16.msra.mxu0 0
        %389 = vmatprep.subr.bf16.mxu0 0
        %390 = vmatpush1.bf16.msra.mxu0 0
        %391 = vmatprep.subr.bf16.mxu0 0
        %392 = vmatpush1.bf16.msra.mxu0 0
        %393 = vmatprep.mubr.bf16.mxu0 0
        %394 = vmatmul.mubr.bf16.gmra.mrb[0].mxu0 %v359
        %v395 = vpop.f32.mrb[0].mxu0
        %v396 = vadd.f32 %v331, %v395
        %v397 = vpop.f32.mrb[0].mxu0
        %v398 = vpop.f32.mrb[0].mxu0
        %v399 = vadd.f32 %v331, %v398
        %v400 = vpop.f32.mrb[0].mxu0
        %401 = vdwg.mxu0
        %vm402 = vcmask 130048
        %403 = vst.msk [vmem:[%s241] sm:$0xff] %vm402, %v396
        %404 = vst.msk [vmem:[%s241 + $0x8] sm:$0xff] %vm402, %v399
        %s405 = smul.u32 2, %s17
        %p406 = scmp.lt.s32.totalorder %s405, 3
        %s407 = scalar_select %p406, %s405, 3
        %s408 = smul.addr %s407, 8
        %s409 = scalar_lea.vmem %s5, %s408
        // Predicated region
        $region45: #{tpu_custom_call.1} parent=39 // pred_check
          %p410 = pneg %p145
        $region46: #{tpu_custom_call.1} parent=39 // pred_check_branch
          %412 = sbr.rel (%p410) target = $region48
        $region47: #{tpu_custom_call.1} parent=39 // pred_region
          %s413 = smul.u32 2, %s17
        $region48: #{tpu_custom_call.1} parent=39 // pred_fallthru
          _
      $region40: #{tpu_custom_call.1} parent=5 // pred_fallthru
        _
      %p414 = scmp.le.s32.totalorder 2, %s12
      // Predicated region
      $region49: #{tpu_custom_call.1} parent=5 // pred_check
        %p415 = pneg %p414
      $region50: #{tpu_custom_call.1} parent=5 // pred_check_branch
        %417 = sbr.rel (%p415) target = $region52
      $region51: #{tpu_custom_call.1} parent=5 // pred_region
        %s418 = ssub.s32 %s12, 2
        // Predicated region
        $region53: #{tpu_custom_call.1} parent=51 // pred_check
          %p419 = pneg %p151
        $region54: #{tpu_custom_call.1} parent=51 // pred_check_branch
          %421 = sbr.rel (%p419) target = $region56
        $region55: #{tpu_custom_call.1} parent=51 // pred_region
          %s422 = smul.u32 2, %s18
          %p423 = scmp.lt.s32.totalorder %s422, 3
          %s424 = scalar_select %p423, %s422, 3
          %s425 = smul.addr %s424, 8
          %s426 = scalar_lea.vmem %s5, %s425
        $region56: #{tpu_custom_call.1} parent=51 // pred_fallthru
          _
      $region52: #{tpu_custom_call.1} parent=5 // pred_fallthru
        _
    $region6: #{tpu_custom_call.1} parent=1 // loop_footer
      %s16 = sadd.s32 1, %s12
    $region7: #{tpu_custom_call.1} parent=1 // loop_footer_branch
      %11 = sbr.rel target = $region3
    $region8: #{tpu_custom_call.1} parent=1 // loop_exit
      _
    %427 = vsyncpa [#allocation3], 1
    %s428 = scalar_lea.sflag [#allocation3], 1
    %429 = vsyncpa %s428, 1

</llo_original>
